<compile_context>
chip_gen: v6e
topology: v6e:2x2x1
jax: 0.10.0
libtpu: 0.0.40
codegen_flags: <defaults>
</compile_context>

<pallas_src>
import jax
import jax.numpy as jnp
from jax import lax
from jax.experimental import pallas as pl
from jax.experimental.pallas import tpu as pltpu


# ----------------------------------------------------------------------------
# Single fused kernel: linear (a1) + baddbmm-with-transposed-v (q_m)
# ----------------------------------------------------------------------------
def fused_kernel(x_ref, w_ref, lb_ref, bias_ref, u_ref, v_ref, a1_ref, qm_ref):
    # Linear: a1 = x @ W^T + b.  Contract the last dim of both operands so the
    # MXU is fed directly (no explicit transpose of W through the XLU).
    a1 = lax.dot_general(
        x_ref[...], w_ref[...],                       # (1, IN) x (OUT, IN)
        dimension_numbers=(((1,), (1,)), ((), ())),   # -> (1, OUT)
        preferred_element_type=jnp.float32,
    ) + lb_ref[...]
    a1_ref[...] = a1.astype(a1_ref.dtype)

    # baddbmm(transpose_b=True): q = bias + u @ v^T (batched).
    # Batched dot_general contracting the trailing K dim of u and v directly.
    acc = lax.dot_general(
        u_ref[...], v_ref[...],                       # (B, M, K) x (B, N, K)
        dimension_numbers=(((2,), (2,)), ((0,), (0,))),  # -> (B, M, N)
        preferred_element_type=jnp.float32,
    )
    qm_ref[...] = (bias_ref[...].astype(jnp.float32) + acc).astype(qm_ref.dtype)


def _full_spec(shape):
    # Full-array block (single grid point): block_shape == array shape.
    return pl.BlockSpec(shape, lambda i: (0,) * len(shape))


def fused_forward(x1, lin_w, lin_b, bias, u, v):
    """Returns (a1, q_m) from one pallas_call."""
    x2 = x1.reshape(1, -1)                      # (1, IN)
    lb2 = lin_b.reshape(1, -1)                  # (1, OUT)
    B, M, N = bias.shape
    out_dim = lin_w.shape[0]

    a1, q_m = pl.pallas_call(
        fused_kernel,
        out_shape=(
            jax.ShapeDtypeStruct((1, out_dim), x1.dtype),
            jax.ShapeDtypeStruct((B, M, N), bias.dtype),
        ),
        grid_spec=pltpu.PrefetchScalarGridSpec(
            num_scalar_prefetch=0,
            grid=(1,),
            in_specs=[
                _full_spec(x2.shape),
                _full_spec(lin_w.shape),
                _full_spec(lb2.shape),
                _full_spec(bias.shape),
                _full_spec(u.shape),
                _full_spec(v.shape),
            ],
            out_specs=(
                _full_spec((1, out_dim)),
                _full_spec((B, M, N)),
            ),
        ),
        compiler_params=pltpu.CompilerParams(
            dimension_semantics=("arbitrary",),
        ),
    )(x2, lin_w, lb2, bias, u, v)
    return a1.reshape(-1), q_m


# ----------------------------------------------------------------------------
# Model (parameters built deterministically in-script)
# ----------------------------------------------------------------------------
class Model:
    def __init__(self, key, B=2, M=8, K=8, N=8):
        ks = jax.random.split(key, 5)
        # nn.Linear(5, 5): weight (5, 5), bias (5,)
        self.lin_w = jax.random.normal(ks[0], (5, 5), jnp.float32) * 0.1
        self.lin_b = jax.random.normal(ks[1], (5,), jnp.float32) * 0.1
        # baddbmm operands (undefined in the torch module; synthesized here)
        self.b = jax.random.normal(ks[2], (B, M, N), jnp.float32)
        self.u = jax.random.normal(ks[3], (B, M, K), jnp.float32)
        self.v = jax.random.normal(ks[4], (B, N, K), jnp.float32)

    def forward(self, x1):
        a1, q_m = fused_forward(x1, self.lin_w, self.lin_b, self.b, self.u, self.v)
        del a1  # computed in-kernel (matches the torch forward), then discarded
        return q_m


if __name__ == "__main__":
    key = jax.random.PRNGKey(0)
    k_model, k_x = jax.random.split(key)
    model = Model(k_model)
    x1 = jax.random.normal(k_x, (5,), jnp.float32)

    # Run the fused kernel once.
    a1, q_m = fused_forward(x1, model.lin_w, model.lin_b, model.b, model.u, model.v)
    jax.block_until_ready(q_m)

    # Reference checks in plain JAX.
    ref_a1 = jnp.dot(model.lin_w, x1) + model.lin_b
    ref_qm = model.b + jnp.einsum("bmk,bnk->bmn", model.u, model.v)
    assert q_m.shape == ref_qm.shape
    assert jnp.allclose(a1, ref_a1, rtol=1e-4, atol=1e-4), "linear mismatch"
    assert jnp.allclose(q_m, ref_qm, rtol=1e-4, atol=1e-4), "baddbmm mismatch"

    # Forward-pass semantics of the original module: only q_m is returned.
    out = model.forward(x1)
    jax.block_until_ready(out)
    assert jnp.allclose(out, ref_qm, rtol=1e-4, atol=1e-4)

    print("KERNEL_OK")
</pallas_src>

<mosaic_0001>
module attributes {stable_mosaic.version = 11 : i64} {
  func.func @fused_kernel(%arg0: i32, %arg1: memref<1x5xf32, #tpu.memory_space<vmem>>, %arg2: memref<5x5xf32, #tpu.memory_space<vmem>>, %arg3: memref<1x5xf32, #tpu.memory_space<vmem>>, %arg4: memref<2x8x8xf32, #tpu.memory_space<vmem>>, %arg5: memref<2x8x8xf32, #tpu.memory_space<vmem>>, %arg6: memref<2x8x8xf32, #tpu.memory_space<vmem>>, %arg7: memref<1x5xf32, #tpu.memory_space<vmem>>, %arg8: memref<2x8x8xf32, #tpu.memory_space<vmem>>) attributes {dimension_semantics = [#tpu.dimension_semantics<arbitrary>], iteration_bounds = array<i64: 1>, scalar_prefetch = 0 : i64, scratch_operands = 0 : i64, tpu.core_type = #tpu.core_type<tc>, window_params = [{pipeline_mode = #tpu.pipeline_mode<synchronous>, transform_indices = @transform_0, window_bounds = array<i64: 1, 5>}, {pipeline_mode = #tpu.pipeline_mode<synchronous>, transform_indices = @transform_1, window_bounds = array<i64: 5, 5>}, {pipeline_mode = #tpu.pipeline_mode<synchronous>, transform_indices = @transform_2, window_bounds = array<i64: 1, 5>}, {pipeline_mode = #tpu.pipeline_mode<synchronous>, transform_indices = @transform_3, window_bounds = array<i64: 2, 8, 8>}, {pipeline_mode = #tpu.pipeline_mode<synchronous>, transform_indices = @transform_4, window_bounds = array<i64: 2, 8, 8>}, {pipeline_mode = #tpu.pipeline_mode<synchronous>, transform_indices = @transform_5, window_bounds = array<i64: 2, 8, 8>}, {pipeline_mode = #tpu.pipeline_mode<synchronous>, transform_indices = @transform_6, window_bounds = array<i64: 1, 5>}, {pipeline_mode = #tpu.pipeline_mode<synchronous>, transform_indices = @transform_7, window_bounds = array<i64: 2, 8, 8>}]} {
    %c0 = arith.constant 0 : index
    %c0_0 = arith.constant 0 : index
    %0 = vector.load %arg1[%c0, %c0_0] : memref<1x5xf32, #tpu.memory_space<vmem>>, vector<1x5xf32>
    %c0_1 = arith.constant 0 : index
    %c0_2 = arith.constant 0 : index
    %1 = vector.load %arg2[%c0_1, %c0_2] : memref<5x5xf32, #tpu.memory_space<vmem>>, vector<5x5xf32>
    %cst = arith.constant dense<0.000000e+00> : vector<1x5xf32>
    %2 = tpu.matmul %0, %1, %cst {dimension_numbers = #tpu.dot_dimension_numbers<[1], [1], [0], [0], [0, 0, 1, 0], [], []>} : vector<1x5xf32>, vector<5x5xf32>, vector<1x5xf32> -> vector<1x5xf32>
    %c0_3 = arith.constant 0 : index
    %c0_4 = arith.constant 0 : index
    %3 = vector.load %arg3[%c0_3, %c0_4] : memref<1x5xf32, #tpu.memory_space<vmem>>, vector<1x5xf32>
    %4 = arith.addf %2, %3 : vector<1x5xf32>
    %c0_5 = arith.constant 0 : index
    %c0_6 = arith.constant 0 : index
    %5 = vector.load %arg7[%c0_5, %c0_6] : memref<1x5xf32, #tpu.memory_space<vmem>>, vector<1x5xf32>
    tpu.vector_store %arg7[%c0_5, %c0_6], %4 {strides = array<i32>} : memref<1x5xf32, #tpu.memory_space<vmem>>, vector<1x5xf32>,
    %c0_7 = arith.constant 0 : index
    %c0_8 = arith.constant 0 : index
    %c0_9 = arith.constant 0 : index
    %6 = vector.load %arg5[%c0_7, %c0_8, %c0_9] : memref<2x8x8xf32, #tpu.memory_space<vmem>>, vector<2x8x8xf32>
    %c0_10 = arith.constant 0 : index
    %c0_11 = arith.constant 0 : index
    %c0_12 = arith.constant 0 : index
    %7 = vector.load %arg6[%c0_10, %c0_11, %c0_12] : memref<2x8x8xf32, #tpu.memory_space<vmem>>, vector<2x8x8xf32>
    %cst_13 = arith.constant dense<0.000000e+00> : vector<2x8x8xf32>
    %8 = tpu.matmul %6, %7, %cst_13 {dimension_numbers = #tpu.dot_dimension_numbers<[2], [2], [1], [1], [0, 0, 0, 1, 1, 1], [0], [0]>} : vector<2x8x8xf32>, vector<2x8x8xf32>, vector<2x8x8xf32> -> vector<2x8x8xf32>
    %c0_14 = arith.constant 0 : index
    %c0_15 = arith.constant 0 : index
    %c0_16 = arith.constant 0 : index
    %9 = vector.load %arg4[%c0_14, %c0_15, %c0_16] : memref<2x8x8xf32, #tpu.memory_space<vmem>>, vector<2x8x8xf32>
    %10 = arith.addf %9, %8 : vector<2x8x8xf32>
    %c0_17 = arith.constant 0 : index
    %c0_18 = arith.constant 0 : index
    %c0_19 = arith.constant 0 : index
    %11 = vector.load %arg8[%c0_17, %c0_18, %c0_19] : memref<2x8x8xf32, #tpu.memory_space<vmem>>, vector<2x8x8xf32>
    tpu.vector_store %arg8[%c0_17, %c0_18, %c0_19], %10 {strides = array<i32>} : memref<2x8x8xf32, #tpu.memory_space<vmem>>, vector<2x8x8xf32>,
    return
  }
  func.func @transform_0(%arg0: i32) -> (i32, i32) {
    %c0_i32 = arith.constant 0 : i32
    %c0_i32_0 = arith.constant 0 : i32
    %c0_i32_1 = arith.constant 0 : i32
    return %c0_i32, %c0_i32_0 : i32, i32
  }
  func.func @transform_1(%arg0: i32) -> (i32, i32) {
    %c0_i32 = arith.constant 0 : i32
    %c0_i32_0 = arith.constant 0 : i32
    %c0_i32_1 = arith.constant 0 : i32
    return %c0_i32, %c0_i32_0 : i32, i32
  }
  func.func @transform_2(%arg0: i32) -> (i32, i32) {
    %c0_i32 = arith.constant 0 : i32
    %c0_i32_0 = arith.constant 0 : i32
    %c0_i32_1 = arith.constant 0 : i32
    return %c0_i32, %c0_i32_0 : i32, i32
  }
  func.func @transform_3(%arg0: i32) -> (i32, i32, i32) {
    %c0_i32 = arith.constant 0 : i32
    %c0_i32_0 = arith.constant 0 : i32
    %c0_i32_1 = arith.constant 0 : i32
    %c0_i32_2 = arith.constant 0 : i32
    return %c0_i32, %c0_i32_0, %c0_i32_1 : i32, i32, i32
  }
  func.func @transform_4(%arg0: i32) -> (i32, i32, i32) {
    %c0_i32 = arith.constant 0 : i32
    %c0_i32_0 = arith.constant 0 : i32
    %c0_i32_1 = arith.constant 0 : i32
    %c0_i32_2 = arith.constant 0 : i32
    return %c0_i32, %c0_i32_0, %c0_i32_1 : i32, i32, i32
  }
  func.func @transform_5(%arg0: i32) -> (i32, i32, i32) {
    %c0_i32 = arith.constant 0 : i32
    %c0_i32_0 = arith.constant 0 : i32
    %c0_i32_1 = arith.constant 0 : i32
    %c0_i32_2 = arith.constant 0 : i32
    return %c0_i32, %c0_i32_0, %c0_i32_1 : i32, i32, i32
  }
  func.func @transform_6(%arg0: i32) -> (i32, i32) {
    %c0_i32 = arith.constant 0 : i32
    %c0_i32_0 = arith.constant 0 : i32
    %c0_i32_1 = arith.constant 0 : i32
    return %c0_i32, %c0_i32_0 : i32, i32
  }
  func.func @transform_7(%arg0: i32) -> (i32, i32, i32) {
    %c0_i32 = arith.constant 0 : i32
    %c0_i32_0 = arith.constant 0 : i32
    %c0_i32_1 = arith.constant 0 : i32
    %c0_i32_2 = arith.constant 0 : i32
    return %c0_i32, %c0_i32_0, %c0_i32_1 : i32, i32, i32
  }
}

</mosaic_0001>

<llo_original>
// kernel: tpu_custom_call.1
$region0: #{tpu_custom_call.1}
  #allocation0 [shape = 'u32[]', space=smem, size = 0x4, offset = 0x4, fixed_abs, tag = 'smem constant byte address 0x4 - core index']
  #allocation1 [shape = 'u32[144,128]{1,0:T(1,128)}', space=vmem, size = 0x12000, scoped, tag = 'internal scratch']
  %s0 = inlined_call_operand.hbm [shape: f32[1,5], index: 0, kind: input, shape index: {}]
  %s1 = inlined_call_operand.hbm [shape: f32[5,5], index: 1, kind: input, shape index: {}]
  %s2 = inlined_call_operand.vmem [shape: f32[1,5], index: 2, kind: input, shape index: {}]
  %s3 = inlined_call_operand.hbm [shape: f32[2,8,8], index: 3, kind: input, shape index: {}]
  %s4 = inlined_call_operand.hbm [shape: f32[2,8,8], index: 4, kind: input, shape index: {}]
  %s5 = inlined_call_operand.hbm [shape: f32[2,8,8], index: 5, kind: input, shape index: {}]
  %s6 = inlined_call_operand.hbm [shape: f32[1,5], index: 6, kind: output, shape index: {0}]
  %s7 = inlined_call_operand.hbm [shape: f32[2,8,8], index: 7, kind: output, shape index: {1}]
  %8 = xla_tuple %s6, %s7
  %s9 = sld [smem:[#allocation0]]
  $region62: #{tpu_custom_call.1} parent=0
    _
  %s11 = ssub.s32 1, %s9
  %s12 = scalar_select 0, %s11, %s9
  $region1: #{tpu_custom_call.1} parent=0
    #allocation2 [shape = 'u8[512]{0}', space=vmem, size = 0x400, scoped, tag = 'input window, operand 0, single buffered']
    #allocation3 [shape = 's32[1]{0}', space=sflag, size = 0x4, scoped, tag = 'scoped memory for tpu_custom_call.1']
    #allocation4 [shape = 's32[1]{0}', space=sflag, size = 0x4, scoped, tag = 'scoped memory for tpu_custom_call.1']
    #allocation5 [shape = 'u8[4096]{0}', space=vmem, size = 0x1000, scoped, tag = 'input window, operand 1, single buffered']
    #allocation6 [shape = 's32[1]{0}', space=sflag, size = 0x4, scoped, tag = 'scoped memory for tpu_custom_call.1']
    #allocation7 [shape = 'u8[8192]{0}', space=vmem, size = 0x2000, scoped, tag = 'input window, operand 3, single buffered']
    #allocation8 [shape = 'u8[8192]{0}', space=vmem, size = 0x2000, scoped, tag = 'input window, operand 4, single buffered']
    #allocation9 [shape = 's32[1]{0}', space=sflag, size = 0x4, scoped, tag = 'scoped memory for tpu_custom_call.1']
    #allocation10 [shape = 'u8[8192]{0}', space=vmem, size = 0x2000, scoped, tag = 'input window, operand 5, single buffered']
    #allocation11 [shape = 'u8[512]{0}', space=vmem, size = 0x400, scoped, tag = 'output window, operand 0, single buffered']
    #allocation12 [shape = 'u8[8192]{0}', space=vmem, size = 0x2000, scoped, tag = 'output window, operand 1, single buffered']
    #allocation13 [shape = 's32[1]{0}', space=sflag, size = 0x4, scoped, tag = 'scoped memory for tpu_custom_call.1']
    %13 = vsyncpa [#allocation3], 0
    %14 = vsyncpa [#allocation6], 0
    %15 = vsyncpa [#allocation9], 0
    %16 = vsyncpa [#allocation4], 0
    %17 = vsyncpa [#allocation13], 0
    // Predicated region
    $region2: #{tpu_custom_call.1} parent=1 // pred_check
      _
    $region3: #{tpu_custom_call.1} parent=1 // pred_check_branch
      %19 = sbr.rel (0) target = $region5
    $region4: #{tpu_custom_call.1} parent=1 // pred_region
      %s21 = ssub.s32 16, 16
      %22 = vsyncadd [#allocation3], %s21
      %s24 = sshll.u32 [#allocation2], 4
      %s25 = int_to_ptr.vmem [resolvable:$true] %s24
      %27 = dma.hbm_to_vmem [thread:$0]  %s0, 16, %s25, [#allocation3]
    $region5: #{tpu_custom_call.1} parent=1 // pred_fallthru
      _
    // Predicated region
    $region6: #{tpu_custom_call.1} parent=1 // pred_check
      _
    $region7: #{tpu_custom_call.1} parent=1 // pred_check_branch
      %29 = sbr.rel (0) target = $region9
    $region8: #{tpu_custom_call.1} parent=1 // pred_region
      %s31 = ssub.s32 128, 128
      %32 = vsyncadd [#allocation6], %s31
      %s34 = sshll.u32 [#allocation5], 4
      %s35 = int_to_ptr.vmem [resolvable:$true] %s34
      %37 = dma.hbm_to_vmem [thread:$0]  %s1, 128, %s35, [#allocation6]
    $region9: #{tpu_custom_call.1} parent=1 // pred_fallthru
      _
    // Predicated region
    $region10: #{tpu_custom_call.1} parent=1 // pred_check
      _
    $region11: #{tpu_custom_call.1} parent=1 // pred_check_branch
      %39 = sbr.rel (0) target = $region13
    $region12: #{tpu_custom_call.1} parent=1 // pred_region
      _
    $region13: #{tpu_custom_call.1} parent=1 // pred_fallthru
      _
    // Predicated region
    $region14: #{tpu_custom_call.1} parent=1 // pred_check
      _
    $region15: #{tpu_custom_call.1} parent=1 // pred_check_branch
      %41 = sbr.rel (0) target = $region17
    $region16: #{tpu_custom_call.1} parent=1 // pred_region
      %s43 = ssub.s32 256, 256
      %44 = vsyncadd [#allocation6], %s43
      %s45 = sshll.u32 [#allocation7], 4
      %s46 = int_to_ptr.vmem [resolvable:$true] %s45
      %51 = dma.hbm_to_vmem [thread:$0]  %s3, 256, %s46, [#allocation6], 128, 128, 8
    $region17: #{tpu_custom_call.1} parent=1 // pred_fallthru
      _
    // Predicated region
    $region18: #{tpu_custom_call.1} parent=1 // pred_check
      _
    $region19: #{tpu_custom_call.1} parent=1 // pred_check_branch
      %53 = sbr.rel (0) target = $region21
    $region20: #{tpu_custom_call.1} parent=1 // pred_region
      %s55 = ssub.s32 256, 256
      %56 = vsyncadd [#allocation9], %s55
      %s57 = sshll.u32 [#allocation8], 4
      %s58 = int_to_ptr.vmem [resolvable:$true] %s57
      %63 = dma.hbm_to_vmem [thread:$0]  %s4, 256, %s58, [#allocation9], 128, 128, 8
    $region21: #{tpu_custom_call.1} parent=1 // pred_fallthru
      _
    // Predicated region
    $region22: #{tpu_custom_call.1} parent=1 // pred_check
      _
    $region23: #{tpu_custom_call.1} parent=1 // pred_check_branch
      %65 = sbr.rel (0) target = $region25
    $region24: #{tpu_custom_call.1} parent=1 // pred_region
      %s67 = ssub.s32 256, 256
      %68 = vsyncadd [#allocation9], %s67
      %s69 = sshll.u32 [#allocation10], 4
      %s70 = int_to_ptr.vmem [resolvable:$true] %s69
      %75 = dma.hbm_to_vmem [thread:$0]  %s5, 256, %s70, [#allocation9], 128, 128, 8
    $region25: #{tpu_custom_call.1} parent=1 // pred_fallthru
      _
    // Predicated region
    $region26: #{tpu_custom_call.1} parent=1 // pred_check
      _
    $region27: #{tpu_custom_call.1} parent=1 // pred_check_branch
      %77 = sbr.rel (0) target = $region29
    $region28: #{tpu_custom_call.1} parent=1 // pred_region
      %78 = dma.done [#allocation3], 16
    $region29: #{tpu_custom_call.1} parent=1 // pred_fallthru
      _
    // Predicated region
    $region30: #{tpu_custom_call.1} parent=1 // pred_check
      _
    $region31: #{tpu_custom_call.1} parent=1 // pred_check_branch
      %80 = sbr.rel (0) target = $region33
    $region32: #{tpu_custom_call.1} parent=1 // pred_region
      %81 = dma.done [#allocation6], 128
    $region33: #{tpu_custom_call.1} parent=1 // pred_fallthru
      _
    // Predicated region
    $region34: #{tpu_custom_call.1} parent=1 // pred_check
      _
    $region35: #{tpu_custom_call.1} parent=1 // pred_check_branch
      %83 = sbr.rel (0) target = $region37
    $region36: #{tpu_custom_call.1} parent=1 // pred_region
      %84 = dma.done [#allocation6], 256
    $region37: #{tpu_custom_call.1} parent=1 // pred_fallthru
      _
    // Predicated region
    $region38: #{tpu_custom_call.1} parent=1 // pred_check
      _
    $region39: #{tpu_custom_call.1} parent=1 // pred_check_branch
      %86 = sbr.rel (0) target = $region41
    $region40: #{tpu_custom_call.1} parent=1 // pred_region
      %87 = dma.done [#allocation9], 256
    $region41: #{tpu_custom_call.1} parent=1 // pred_fallthru
      _
    // Predicated region
    $region42: #{tpu_custom_call.1} parent=1 // pred_check
      _
    $region43: #{tpu_custom_call.1} parent=1 // pred_check_branch
      %89 = sbr.rel (0) target = $region45
    $region44: #{tpu_custom_call.1} parent=1 // pred_region
      %90 = dma.done [#allocation9], 256
    $region45: #{tpu_custom_call.1} parent=1 // pred_fallthru
      _
    %v91 = vld [vmem:[#allocation2] sm:$0x1]
    %v92 = vld [vmem:[#allocation5] sm:$0x1f]
    %v93 = vld [vmem:[%s2] sm:$0x1]
    %vm94 = vcmask 39936
    %v96 = vsel %vm94, %v91, 0
    %v99 = vsel %vm94, %v92, 0
    %101 = vmatprep.subr.mxu0 0.0
    %102 = vmatpush1.xpose.msra.mxu0 0.0
    %103 = vmatprep.subr.mxu0 0.0
    %104 = vmatpush1.xpose.msra.mxu0 0.0
    %105 = vmatprep.subr.mxu0 0.0
    %106 = vmatpush1.xpose.msra.mxu0 0.0
    %107 = vmatprep.subr.mxu0 0.0
    %108 = vmatpush1.xpose.msra.mxu0 0.0
    %109 = vmatprep.subr.mxu0 0.0
    %110 = vmatpush1.xpose.msra.mxu0 0.0
    %111 = vmatprep.subr.mxu0 0.0
    %112 = vmatpush1.xpose.msra.mxu0 0.0
    %113 = vmatprep.subr.mxu0 0.0
    %114 = vmatpush1.xpose.msra.mxu0 0.0
    %115 = vmatprep.subr.mxu0 0.0
    %116 = vmatpush1.xpose.msra.mxu0 0.0
    %117 = vmatprep.subr.mxu0 0.0
    %118 = vmatpush1.xpose.msra.mxu0 0.0
    %119 = vmatprep.subr.mxu0 0.0
    %120 = vmatpush1.xpose.msra.mxu0 0.0
    %121 = vmatprep.subr.mxu0 0.0
    %122 = vmatpush1.xpose.msra.mxu0 0.0
    %123 = vmatprep.subr.mxu0 0.0
    %124 = vmatpush1.xpose.msra.mxu0 0.0
    %125 = vmatprep.subr.mxu0 0.0
    %126 = vmatpush1.xpose.msra.mxu0 0.0
    %127 = vmatprep.subr.mxu0 0.0
    %128 = vmatpush1.xpose.msra.mxu0 0.0
    %129 = vmatprep.subr.mxu0 0.0
    %130 = vmatpush1.xpose.msra.mxu0 0.0
    %131 = vmatprep.subr.mxu0 0.0
    %132 = vmatpush1.xpose.msra.mxu0 %v99
    %133 = vmatprep.subr.mxu0 0.0
    %134 = vmatpush2.xpose.msra.mxu0 0.0
    %135 = vmatprep.subr.mxu0 0.0
    %136 = vmatpush2.xpose.msra.mxu0 0.0
    %137 = vmatprep.subr.mxu0 0.0
    %138 = vmatpush2.xpose.msra.mxu0 0.0
    %139 = vmatprep.subr.mxu0 0.0
    %140 = vmatpush2.xpose.msra.mxu0 0.0
    %141 = vmatprep.subr.mxu0 0.0
    %142 = vmatpush2.xpose.msra.mxu0 0.0
    %143 = vmatprep.subr.mxu0 0.0
    %144 = vmatpush2.xpose.msra.mxu0 0.0
    %145 = vmatprep.subr.mxu0 0.0
    %146 = vmatpush2.xpose.msra.mxu0 0.0
    %147 = vmatprep.subr.mxu0 0.0
    %148 = vmatpush2.xpose.msra.mxu0 0.0
    %149 = vmatprep.subr.mxu0 0.0
    %150 = vmatpush2.xpose.msra.mxu0 0.0
    %151 = vmatprep.subr.mxu0 0.0
    %152 = vmatpush2.xpose.msra.mxu0 0.0
    %153 = vmatprep.subr.mxu0 0.0
    %154 = vmatpush2.xpose.msra.mxu0 0.0
    %155 = vmatprep.subr.mxu0 0.0
    %156 = vmatpush2.xpose.msra.mxu0 0.0
    %157 = vmatprep.subr.mxu0 0.0
    %158 = vmatpush2.xpose.msra.mxu0 0.0
    %159 = vmatprep.subr.mxu0 0.0
    %160 = vmatpush2.xpose.msra.mxu0 0.0
    %161 = vmatprep.subr.mxu0 0.0
    %162 = vmatpush2.xpose.msra.mxu0 0.0
    %163 = vmatprep.subr.mxu0 0.0
    %164 = vmatpush2.xpose.msra.mxu0 0.0
    %165 = vmatprep.mubr.f32.mxu0 0.0
    %166 = vmatmul.mubr.f32.gmra.mxu0 %v96
    %v167 = vpop.f32.mrf.mxu0
    %v168 = vadd.f32 %v93, %v167
    %v169 = vpop.f32.mrf.mxu0
    %170 = vdwg.mxu0
    %vm171 = vcmask 32768
    %172 = vst.msk [vmem:[#allocation11] sm:$0x1] %vm171, %v168
    %v173 = vld [vmem:[#allocation8] sm:$0xff]
    %v174 = vld [vmem:[#allocation8 + $0x8] sm:$0xff]
    %v175 = vld [vmem:[#allocation10] sm:$0xff]
    %v176 = vld [vmem:[#allocation10 + $0x8] sm:$0xff]
    %vm177 = vcmask 64512
    %v179 = vsel %vm177, %v173, 0
    %v182 = vsel %vm177, %v175, 0
    %184 = vmatprep.subr.mxu0 0.0
    %185 = vmatpush1.xpose.msra.mxu0 0.0
    %186 = vmatprep.subr.mxu0 0.0
    %187 = vmatpush1.xpose.msra.mxu0 0.0
    %188 = vmatprep.subr.mxu0 0.0
    %189 = vmatpush1.xpose.msra.mxu0 0.0
    %190 = vmatprep.subr.mxu0 0.0
    %191 = vmatpush1.xpose.msra.mxu0 0.0
    %192 = vmatprep.subr.mxu0 0.0
    %193 = vmatpush1.xpose.msra.mxu0 0.0
    %194 = vmatprep.subr.mxu0 0.0
    %195 = vmatpush1.xpose.msra.mxu0 0.0
    %196 = vmatprep.subr.mxu0 0.0
    %197 = vmatpush1.xpose.msra.mxu0 0.0
    %198 = vmatprep.subr.mxu0 0.0
    %199 = vmatpush1.xpose.msra.mxu0 0.0
    %200 = vmatprep.subr.mxu0 0.0
    %201 = vmatpush1.xpose.msra.mxu0 0.0
    %202 = vmatprep.subr.mxu0 0.0
    %203 = vmatpush1.xpose.msra.mxu0 0.0
    %204 = vmatprep.subr.mxu0 0.0
    %205 = vmatpush1.xpose.msra.mxu0 0.0
    %206 = vmatprep.subr.mxu0 0.0
    %207 = vmatpush1.xpose.msra.mxu0 0.0
    %208 = vmatprep.subr.mxu0 0.0
    %209 = vmatpush1.xpose.msra.mxu0 0.0
    %210 = vmatprep.subr.mxu0 0.0
    %211 = vmatpush1.xpose.msra.mxu0 0.0
    %212 = vmatprep.subr.mxu0 0.0
    %213 = vmatpush1.xpose.msra.mxu0 0.0
    %214 = vmatprep.subr.mxu0 0.0
    %215 = vmatpush1.xpose.msra.mxu0 %v182
    %216 = vmatprep.subr.mxu0 0.0
    %217 = vmatpush2.xpose.msra.mxu0 0.0
    %218 = vmatprep.subr.mxu0 0.0
    %219 = vmatpush2.xpose.msra.mxu0 0.0
    %220 = vmatprep.subr.mxu0 0.0
    %221 = vmatpush2.xpose.msra.mxu0 0.0
    %222 = vmatprep.subr.mxu0 0.0
    %223 = vmatpush2.xpose.msra.mxu0 0.0
    %224 = vmatprep.subr.mxu0 0.0
    %225 = vmatpush2.xpose.msra.mxu0 0.0
    %226 = vmatprep.subr.mxu0 0.0
    %227 = vmatpush2.xpose.msra.mxu0 0.0
    %228 = vmatprep.subr.mxu0 0.0
    %229 = vmatpush2.xpose.msra.mxu0 0.0
    %230 = vmatprep.subr.mxu0 0.0
    %231 = vmatpush2.xpose.msra.mxu0 0.0
    %232 = vmatprep.subr.mxu0 0.0
    %233 = vmatpush2.xpose.msra.mxu0 0.0
    %234 = vmatprep.subr.mxu0 0.0
    %235 = vmatpush2.xpose.msra.mxu0 0.0
    %236 = vmatprep.subr.mxu0 0.0
    %237 = vmatpush2.xpose.msra.mxu0 0.0
    %238 = vmatprep.subr.mxu0 0.0
    %239 = vmatpush2.xpose.msra.mxu0 0.0
    %240 = vmatprep.subr.mxu0 0.0
    %241 = vmatpush2.xpose.msra.mxu0 0.0
    %242 = vmatprep.subr.mxu0 0.0
    %243 = vmatpush2.xpose.msra.mxu0 0.0
    %244 = vmatprep.subr.mxu0 0.0
    %245 = vmatpush2.xpose.msra.mxu0 0.0
    %246 = vmatprep.subr.mxu0 0.0
    %247 = vmatpush2.xpose.msra.mxu0 0.0
    %248 = vmatprep.mubr.f32.mxu0 0.0
    %249 = vmatmul.mubr.f32.gmra.mxu0 %v179
    %v250 = vpop.f32.mrf.mxu0
    %v251 = vadd.f32 0.0, %v250
    %v252 = vpop.f32.mrf.mxu0
    %253 = vdwg.mxu0
    %v255 = vsel %vm177, %v174, 0
    %v258 = vsel %vm177, %v176, 0
    %260 = vmatprep.subr.mxu0 0.0
    %261 = vmatpush1.xpose.msra.mxu0 0.0
    %262 = vmatprep.subr.mxu0 0.0
    %263 = vmatpush1.xpose.msra.mxu0 0.0
    %264 = vmatprep.subr.mxu0 0.0
    %265 = vmatpush1.xpose.msra.mxu0 0.0
    %266 = vmatprep.subr.mxu0 0.0
    %267 = vmatpush1.xpose.msra.mxu0 0.0
    %268 = vmatprep.subr.mxu0 0.0
    %269 = vmatpush1.xpose.msra.mxu0 0.0
    %270 = vmatprep.subr.mxu0 0.0
    %271 = vmatpush1.xpose.msra.mxu0 0.0
    %272 = vmatprep.subr.mxu0 0.0
    %273 = vmatpush1.xpose.msra.mxu0 0.0
    %274 = vmatprep.subr.mxu0 0.0
    %275 = vmatpush1.xpose.msra.mxu0 0.0
    %276 = vmatprep.subr.mxu0 0.0
    %277 = vmatpush1.xpose.msra.mxu0 0.0
    %278 = vmatprep.subr.mxu0 0.0
    %279 = vmatpush1.xpose.msra.mxu0 0.0
    %280 = vmatprep.subr.mxu0 0.0
    %281 = vmatpush1.xpose.msra.mxu0 0.0
    %282 = vmatprep.subr.mxu0 0.0
    %283 = vmatpush1.xpose.msra.mxu0 0.0
    %284 = vmatprep.subr.mxu0 0.0
    %285 = vmatpush1.xpose.msra.mxu0 0.0
    %286 = vmatprep.subr.mxu0 0.0
    %287 = vmatpush1.xpose.msra.mxu0 0.0
    %288 = vmatprep.subr.mxu0 0.0
    %289 = vmatpush1.xpose.msra.mxu0 0.0
    %290 = vmatprep.subr.mxu0 0.0
    %291 = vmatpush1.xpose.msra.mxu0 %v258
    %292 = vmatprep.subr.mxu0 0.0
    %293 = vmatpush2.xpose.msra.mxu0 0.0
    %294 = vmatprep.subr.mxu0 0.0
    %295 = vmatpush2.xpose.msra.mxu0 0.0
    %296 = vmatprep.subr.mxu0 0.0
    %297 = vmatpush2.xpose.msra.mxu0 0.0
    %298 = vmatprep.subr.mxu0 0.0
    %299 = vmatpush2.xpose.msra.mxu0 0.0
    %300 = vmatprep.subr.mxu0 0.0
    %301 = vmatpush2.xpose.msra.mxu0 0.0
    %302 = vmatprep.subr.mxu0 0.0
    %303 = vmatpush2.xpose.msra.mxu0 0.0
    %304 = vmatprep.subr.mxu0 0.0
    %305 = vmatpush2.xpose.msra.mxu0 0.0
    %306 = vmatprep.subr.mxu0 0.0
    %307 = vmatpush2.xpose.msra.mxu0 0.0
    %308 = vmatprep.subr.mxu0 0.0
    %309 = vmatpush2.xpose.msra.mxu0 0.0
    %310 = vmatprep.subr.mxu0 0.0
    %311 = vmatpush2.xpose.msra.mxu0 0.0
    %312 = vmatprep.subr.mxu0 0.0
    %313 = vmatpush2.xpose.msra.mxu0 0.0
    %314 = vmatprep.subr.mxu0 0.0
    %315 = vmatpush2.xpose.msra.mxu0 0.0
    %316 = vmatprep.subr.mxu0 0.0
    %317 = vmatpush2.xpose.msra.mxu0 0.0
    %318 = vmatprep.subr.mxu0 0.0
    %319 = vmatpush2.xpose.msra.mxu0 0.0
    %320 = vmatprep.subr.mxu0 0.0
    %321 = vmatpush2.xpose.msra.mxu0 0.0
    %322 = vmatprep.subr.mxu0 0.0
    %323 = vmatpush2.xpose.msra.mxu0 0.0
    %324 = vmatprep.mubr.f32.mxu0 0.0
    %325 = vmatmul.mubr.f32.gmra.mxu0 %v255
    %v326 = vpop.f32.mrf.mxu0
    %v327 = vadd.f32 0.0, %v326
    %v328 = vpop.f32.mrf.mxu0
    %329 = vdwg.mxu0
    %v330 = vld [vmem:[#allocation7] sm:$0xff]
    %v331 = vld [vmem:[#allocation7 + $0x8] sm:$0xff]
    %v332 = vadd.f32 %v330, %v251
    %v333 = vadd.f32 %v331, %v327
    %334 = vst.msk [vmem:[#allocation12] sm:$0xff] %vm177, %v332
    %335 = vst.msk [vmem:[#allocation12 + $0x8] sm:$0xff] %vm177, %v333
    // Predicated region
    $region46: #{tpu_custom_call.1} parent=1 // pred_check
      _
    $region47: #{tpu_custom_call.1} parent=1 // pred_check_branch
      %337 = sbr.rel (0) target = $region49
    $region48: #{tpu_custom_call.1} parent=1 // pred_region
      %s339 = ssub.s32 16, 16
      %340 = vsyncadd [#allocation4], %s339
      %s342 = sshll.u32 [#allocation11], 4
      %s343 = int_to_ptr.vmem [resolvable:$true] %s342
      %345 = dma.vmem_to_hbm [thread:$0]  %s343, 16, %s6, [#allocation4]
    $region49: #{tpu_custom_call.1} parent=1 // pred_fallthru
      _
    // Predicated region
    $region50: #{tpu_custom_call.1} parent=1 // pred_check
      _
    $region51: #{tpu_custom_call.1} parent=1 // pred_check_branch
      %347 = sbr.rel (0) target = $region53
    $region52: #{tpu_custom_call.1} parent=1 // pred_region
      %s349 = ssub.s32 256, 256
      %350 = vsyncadd [#allocation13], %s349
      %s351 = sshll.u32 [#allocation12], 4
      %s352 = int_to_ptr.vmem [resolvable:$true] %s351
      %357 = dma.vmem_to_hbm [thread:$0]  %s352, 256, %s7, [#allocation13], 128, 128, 8
    $region53: #{tpu_custom_call.1} parent=1 // pred_fallthru
      _
    // Predicated region
    $region54: #{tpu_custom_call.1} parent=1 // pred_check
      _
    $region55: #{tpu_custom_call.1} parent=1 // pred_check_branch
      %359 = sbr.rel (0) target = $region57
    $region56: #{tpu_custom_call.1} parent=1 // pred_region
      %360 = dma.done [#allocation4], 16
    $region57: #{tpu_custom_call.1} parent=1 // pred_fallthru
      _
    // Predicated region
    $region58: #{tpu_custom_call.1} parent=1 // pred_check
      _
    $region59: #{tpu_custom_call.1} parent=1 // pred_check_branch
      %362 = sbr.rel (0) target = $region61
    $region60: #{tpu_custom_call.1} parent=1 // pred_region
      %363 = dma.done [#allocation13], 256
    $region61: #{tpu_custom_call.1} parent=1 // pred_fallthru
      _
    %364 = vsyncpa [#allocation3], 1
    %365 = vsyncpa [#allocation6], 1
    %366 = vsyncpa [#allocation9], 1
    %367 = vsyncpa [#allocation4], 1
    %368 = vsyncpa [#allocation13], 1

</llo_original>
